<compile_context>
chip_gen: v7x
topology: tpu7x:2x2x1
jax: 0.10.0
libtpu: 0.0.40
codegen_flags: <defaults>
</compile_context>

<pallas_src>
import functools

import jax
import jax.numpy as jnp
from jax.experimental import pallas as pl
from jax.experimental.pallas import tpu as pltpu


def _round_up(x: int, m: int) -> int:
    return ((x + m - 1) // m) * m


def _cdiv(a: int, b: int) -> int:
    return -(-a // b)


def _disc_kernel(xT_ref, w1T_ref, b1_ref, w2T_ref, b2_ref, w3T_ref, b3_ref,
                 o_ref):
    """Fused transposed MLP for one batch tile (batch on the lane axis).

    xT  : (d_in_pad, TB) bf16
    w1T : (h1, d_in_pad) bf16    b1 : (h1, 1) f32
    w2T : (h2, h1)       bf16    b2 : (h2, 1) f32
    w3T : (1,  h2)       bf16    b3 : (1, 1)  f32
    o   : (1, TB)        f32  -- lane-dense sigmoid outputs
    """
    # ---- layer 1: (h1, d_in) @ (d_in, TB) -> (h1, TB), f32 MXU accumulation ----
    h = jnp.dot(w1T_ref[...], xT_ref[...], preferred_element_type=jnp.float32)
    h = jnp.maximum(h + b1_ref[...], 0.0)                       # bias+ReLU in f32

    # ---- layer 2 ----
    h = jnp.dot(w2T_ref[...], h.astype(w2T_ref.dtype),
                preferred_element_type=jnp.float32)
    h = jnp.maximum(h + b2_ref[...], 0.0)

    # ---- layer 3 + exact f32 sigmoid on the lane-dense (1, TB) row ----
    z = jnp.dot(w3T_ref[...], h.astype(w3T_ref.dtype),
                preferred_element_type=jnp.float32)
    z = z + b3_ref[...]
    o_ref[...] = 1.0 / (1.0 + jnp.exp(-z))


def discriminator_forward(state, action, logpi, lossf, params,
                          *, block_b=8192, compute_dtype=jnp.bfloat16):
    """JAX wrapper mirroring Discriminator.forward (returns a flat (B,) vector)."""
    state = jnp.asarray(state, jnp.float32)
    action = jnp.asarray(action, jnp.float32)
    logpi = jnp.asarray(logpi, jnp.float32)
    lossf = jnp.asarray(lossf, jnp.float32)

    w1, b1, w2, b2, w3, b3 = params
    B = state.shape[0]
    d_in = (state.shape[-1] + action.shape[-1]
            + logpi.shape[-1] + lossf.shape[-1])
    if w1.shape[0] != d_in:
        raise ValueError(
            f"W1 expects input width {w1.shape[0]}, but "
            f"state/action/logpi/lossf concat to {d_in}")
    h1, h2 = w1.shape[1], w2.shape[1]

    # ---- batch tiling: few fat tiles, bounded padding, >=2 tiles when large ----
    num_tiles = max(1, _cdiv(B, block_b))
    if num_tiles == 1 and B > 256:
        num_tiles = 2                      # keep both v7x TensorCores busy
    tb = _round_up(_cdiv(B, num_tiles), 128)
    num_tiles = _cdiv(B, tb)
    b_pad = tb * num_tiles

    # ---- pack + transpose inputs (cheap fused XLA ops, done once per call) ----
    d_in_pad = _round_up(d_in, 32)
    x = jnp.concatenate([state, action, logpi, lossf], axis=-1)
    x = jnp.pad(x, ((0, b_pad - B), (0, d_in_pad - d_in)))
    xT = x.T.astype(compute_dtype)                            # (d_in_pad, b_pad)

    w1T = jnp.pad(jnp.transpose(w1), ((0, 0), (0, d_in_pad - d_in))
                  ).astype(compute_dtype)                     # (h1, d_in_pad)
    w2T = jnp.transpose(w2).astype(compute_dtype)             # (h2, h1)
    w3T = jnp.transpose(w3).astype(compute_dtype)             # (1, h2)
    b1c = jnp.reshape(b1, (h1, 1)).astype(jnp.float32)
    b2c = jnp.reshape(b2, (h2, 1)).astype(jnp.float32)
    b3c = jnp.reshape(b3, (1, 1)).astype(jnp.float32)

    def resident(a):  # whole array stays in VMEM across the grid
        return pl.BlockSpec(a.shape, lambda i: (0, 0))

    out = pl.pallas_call(
        _disc_kernel,
        out_shape=jax.ShapeDtypeStruct((1, b_pad), jnp.float32),
        grid_spec=pltpu.PrefetchScalarGridSpec(
            num_scalar_prefetch=0,
            grid=(num_tiles,),
            in_specs=[
                pl.BlockSpec((d_in_pad, tb), lambda i: (0, i)),   # X^T tile
                resident(w1T), resident(b1c),
                resident(w2T), resident(b2c),
                resident(w3T), resident(b3c),
            ],
            out_specs=pl.BlockSpec((1, tb), lambda i: (0, i)),    # lane-dense row
        ),
        compiler_params=pltpu.CompilerParams(
            dimension_semantics=("parallel",)),   # shard batch grid across TCs
    )(xT, w1T, b1c, w2T, b2c, w3T, b3c)

    return out.reshape(-1)[:B]


def discriminator_reference(state, action, logpi, lossf, params):
    """Pure-JAX f32 reference mirroring the PyTorch module exactly."""
    w1, b1, w2, b2, w3, b3 = params
    x = jnp.concatenate([state, action, logpi, lossf], axis=-1).astype(jnp.float32)
    h = jnp.maximum(x @ w1 + jnp.reshape(b1, (1, -1)), 0.0)
    h = jnp.maximum(h @ w2 + jnp.reshape(b2, (1, -1)), 0.0)
    h = jax.nn.sigmoid(h @ w3 + jnp.reshape(b3, (1, -1)))
    return h.reshape(-1)


def init_params(key, state_dim, action_dim, fc_layer_params):
    """PyTorch-default-style init (uniform +- 1/sqrt(fan_in))."""
    in_dim = 2 * state_dim + 2 * action_dim
    sizes = [in_dim] + list(fc_layer_params) + [1]
    params = []
    for fan_in, fan_out in zip(sizes[:-1], sizes[1:]):
        key, kw, kb = jax.random.split(key, 3)
        bound = 1.0 / jnp.sqrt(jnp.asarray(fan_in, jnp.float32))
        w = jax.random.uniform(kw, (fan_in, fan_out), jnp.float32, -bound, bound)
        b = jax.random.uniform(kb, (1, fan_out), jnp.float32, -bound, bound)
        params += [w, b]
    return tuple(params)


if __name__ == "__main__":
    # Small shapes consistent with the module:
    #   state_dim=8, action_dim=4 -> MLP input dim = 2*8 + 2*4 = 24
    #   fc_layer_params = (32, 32)
    # NOTE: at B=8 this is pure fixed overhead; the fat-tile / packed-transposed
    # input / lane-dense epilogue levers pay off at B in the thousands.
    batch = 8
    state_dim = 8
    action_dim = 4
    fc_layer_params = (32, 32)

    key = jax.random.PRNGKey(0)
    kp, ks, ka, kl, kf = jax.random.split(key, 5)

    params = init_params(kp, state_dim, action_dim, fc_layer_params)

    state = jax.random.normal(ks, (batch, state_dim), jnp.float32)
    action = jax.random.normal(ka, (batch, action_dim), jnp.float32)
    logpi = jax.random.normal(kl, (batch, state_dim), jnp.float32)
    lossf = jax.random.normal(kf, (batch, action_dim), jnp.float32)

    fwd = jax.jit(functools.partial(discriminator_forward, params=params))
    out = fwd(state, action, logpi, lossf)
    jax.block_until_ready(out)

    ref = discriminator_reference(state, action, logpi, lossf, params)

    assert out.shape == (batch,), out.shape
    assert bool(jnp.all((out >= -1e-3) & (out <= 1.0 + 1e-3))), "sigmoid out of range"
    max_err = float(jnp.max(jnp.abs(out - ref)))
    assert bool(jnp.allclose(out, ref, atol=2e-2, rtol=2e-2)), f"max_err={max_err}"
    print("KERNEL_OK")
</pallas_src>

<mosaic_0001>
module attributes {stable_mosaic.version = 11 : i64} {
  func.func @_disc_kernel(%arg0: i32, %arg1: memref<32x128xbf16, #tpu.memory_space<vmem>>, %arg2: memref<32x32xbf16, #tpu.memory_space<vmem>>, %arg3: memref<32x1xf32, #tpu.memory_space<vmem>>, %arg4: memref<32x32xbf16, #tpu.memory_space<vmem>>, %arg5: memref<32x1xf32, #tpu.memory_space<vmem>>, %arg6: memref<1x32xbf16, #tpu.memory_space<vmem>>, %arg7: memref<1x1xf32, #tpu.memory_space<vmem>>, %arg8: memref<1x128xf32, #tpu.memory_space<vmem>>) attributes {dimension_semantics = [#tpu.dimension_semantics<parallel>], iteration_bounds = array<i64: 1>, scalar_prefetch = 0 : i64, scratch_operands = 0 : i64, tpu.core_type = #tpu.core_type<tc>, window_params = [{transform_indices = @transform_0, window_bounds = array<i64: 32, 128>}, {pipeline_mode = #tpu.pipeline_mode<synchronous>, transform_indices = @transform_1, window_bounds = array<i64: 32, 32>}, {pipeline_mode = #tpu.pipeline_mode<synchronous>, transform_indices = @transform_2, window_bounds = array<i64: 32, 1>}, {pipeline_mode = #tpu.pipeline_mode<synchronous>, transform_indices = @transform_3, window_bounds = array<i64: 32, 32>}, {pipeline_mode = #tpu.pipeline_mode<synchronous>, transform_indices = @transform_4, window_bounds = array<i64: 32, 1>}, {pipeline_mode = #tpu.pipeline_mode<synchronous>, transform_indices = @transform_5, window_bounds = array<i64: 1, 32>}, {pipeline_mode = #tpu.pipeline_mode<synchronous>, transform_indices = @transform_6, window_bounds = array<i64: 1, 1>}, {transform_indices = @transform_7, window_bounds = array<i64: 1, 128>}]} {
    %c0 = arith.constant 0 : index
    %c0_0 = arith.constant 0 : index
    %0 = vector.load %arg2[%c0, %c0_0] : memref<32x32xbf16, #tpu.memory_space<vmem>>, vector<32x32xbf16>
    %c0_1 = arith.constant 0 : index
    %c0_2 = arith.constant 0 : index
    %1 = vector.load %arg1[%c0_1, %c0_2] : memref<32x128xbf16, #tpu.memory_space<vmem>>, vector<32x128xbf16>
    %cst = arith.constant dense<0.000000e+00> : vector<32x128xf32>
    %2 = tpu.matmul %0, %1, %cst {dimension_numbers = #tpu.dot_dimension_numbers<[1], [0], [0], [1], [0, 0, 1, 1], [], []>} : vector<32x32xbf16>, vector<32x128xbf16>, vector<32x128xf32> -> vector<32x128xf32>
    %c0_3 = arith.constant 0 : index
    %c0_4 = arith.constant 0 : index
    %3 = vector.load %arg3[%c0_3, %c0_4] : memref<32x1xf32, #tpu.memory_space<vmem>>, vector<32x1xf32>
    %4 = vector.broadcast %3 : vector<32x1xf32> to vector<32x128xf32>
    %5 = arith.addf %2, %4 : vector<32x128xf32>
    %cst_5 = arith.constant 0.000000e+00 : f32
    %6 = vector.broadcast %cst_5 : f32 to vector<32x128xf32>
    %7 = arith.maximumf %5, %6 : vector<32x128xf32>
    %c0_6 = arith.constant 0 : index
    %c0_7 = arith.constant 0 : index
    %8 = vector.load %arg4[%c0_6, %c0_7] : memref<32x32xbf16, #tpu.memory_space<vmem>>, vector<32x32xbf16>
    %9 = arith.truncf %7 : vector<32x128xf32> to vector<32x128xbf16>
    %cst_8 = arith.constant dense<0.000000e+00> : vector<32x128xf32>
    %10 = tpu.matmul %8, %9, %cst_8 {dimension_numbers = #tpu.dot_dimension_numbers<[1], [0], [0], [1], [0, 0, 1, 1], [], []>} : vector<32x32xbf16>, vector<32x128xbf16>, vector<32x128xf32> -> vector<32x128xf32>
    %c0_9 = arith.constant 0 : index
    %c0_10 = arith.constant 0 : index
    %11 = vector.load %arg5[%c0_9, %c0_10] : memref<32x1xf32, #tpu.memory_space<vmem>>, vector<32x1xf32>
    %12 = vector.broadcast %11 : vector<32x1xf32> to vector<32x128xf32>
    %13 = arith.addf %10, %12 : vector<32x128xf32>
    %cst_11 = arith.constant 0.000000e+00 : f32
    %14 = vector.broadcast %cst_11 : f32 to vector<32x128xf32>
    %15 = arith.maximumf %13, %14 : vector<32x128xf32>
    %c0_12 = arith.constant 0 : index
    %c0_13 = arith.constant 0 : index
    %16 = vector.load %arg6[%c0_12, %c0_13] : memref<1x32xbf16, #tpu.memory_space<vmem>>, vector<1x32xbf16>
    %17 = arith.truncf %15 : vector<32x128xf32> to vector<32x128xbf16>
    %cst_14 = arith.constant dense<0.000000e+00> : vector<1x128xf32>
    %18 = tpu.matmul %16, %17, %cst_14 {dimension_numbers = #tpu.dot_dimension_numbers<[1], [0], [0], [1], [0, 0, 1, 1], [], []>} : vector<1x32xbf16>, vector<32x128xbf16>, vector<1x128xf32> -> vector<1x128xf32>
    %c0_15 = arith.constant 0 : index
    %c0_16 = arith.constant 0 : index
    %19 = vector.load %arg7[%c0_15, %c0_16] : memref<1x1xf32, #tpu.memory_space<vmem>>, vector<1x1xf32>
    %20 = vector.broadcast %19 : vector<1x1xf32> to vector<1x128xf32>
    %21 = arith.addf %18, %20 : vector<1x128xf32>
    %cst_17 = arith.constant 0.000000e+00 : f32
    %22 = vector.broadcast %cst_17 : f32 to vector<1x128xf32>
    %23 = arith.subf %22, %21 : vector<1x128xf32>
    %24 = math.exp %23 : vector<1x128xf32>
    %cst_18 = arith.constant 1.000000e+00 : f32
    %25 = vector.broadcast %cst_18 : f32 to vector<1x128xf32>
    %26 = arith.addf %25, %24 : vector<1x128xf32>
    %cst_19 = arith.constant 1.000000e+00 : f32
    %27 = vector.broadcast %cst_19 : f32 to vector<1x128xf32>
    %28 = arith.divf %27, %26 : vector<1x128xf32>
    %c0_20 = arith.constant 0 : index
    %c0_21 = arith.constant 0 : index
    %29 = vector.load %arg8[%c0_20, %c0_21] : memref<1x128xf32, #tpu.memory_space<vmem>>, vector<1x128xf32>
    tpu.vector_store %arg8[%c0_20, %c0_21], %28 {strides = array<i32>} : memref<1x128xf32, #tpu.memory_space<vmem>>, vector<1x128xf32>,
    return
  }
  func.func @transform_0(%arg0: i32) -> (i32, i32) {
    %c0_i32 = arith.constant 0 : i32
    %c0_i32_0 = arith.constant 0 : i32
    return %c0_i32, %arg0 : i32, i32
  }
  func.func @transform_1(%arg0: i32) -> (i32, i32) {
    %c0_i32 = arith.constant 0 : i32
    %c0_i32_0 = arith.constant 0 : i32
    %c0_i32_1 = arith.constant 0 : i32
    return %c0_i32, %c0_i32_0 : i32, i32
  }
  func.func @transform_2(%arg0: i32) -> (i32, i32) {
    %c0_i32 = arith.constant 0 : i32
    %c0_i32_0 = arith.constant 0 : i32
    %c0_i32_1 = arith.constant 0 : i32
    return %c0_i32, %c0_i32_0 : i32, i32
  }
  func.func @transform_3(%arg0: i32) -> (i32, i32) {
    %c0_i32 = arith.constant 0 : i32
    %c0_i32_0 = arith.constant 0 : i32
    %c0_i32_1 = arith.constant 0 : i32
    return %c0_i32, %c0_i32_0 : i32, i32
  }
  func.func @transform_4(%arg0: i32) -> (i32, i32) {
    %c0_i32 = arith.constant 0 : i32
    %c0_i32_0 = arith.constant 0 : i32
    %c0_i32_1 = arith.constant 0 : i32
    return %c0_i32, %c0_i32_0 : i32, i32
  }
  func.func @transform_5(%arg0: i32) -> (i32, i32) {
    %c0_i32 = arith.constant 0 : i32
    %c0_i32_0 = arith.constant 0 : i32
    %c0_i32_1 = arith.constant 0 : i32
    return %c0_i32, %c0_i32_0 : i32, i32
  }
  func.func @transform_6(%arg0: i32) -> (i32, i32) {
    %c0_i32 = arith.constant 0 : i32
    %c0_i32_0 = arith.constant 0 : i32
    %c0_i32_1 = arith.constant 0 : i32
    return %c0_i32, %c0_i32_0 : i32, i32
  }
  func.func @transform_7(%arg0: i32) -> (i32, i32) {
    %c0_i32 = arith.constant 0 : i32
    %c0_i32_0 = arith.constant 0 : i32
    return %c0_i32, %arg0 : i32, i32
  }
}

</mosaic_0001>

<llo_original>
// kernel: discriminator_forward.1
$region0: #{discriminator_forward.1}
  #allocation0 [shape = 'u32[]', space=smem, size = 0x4, offset = 0x4, fixed_abs, tag = 'smem constant byte address 0x4 - core index']
  #allocation1 [shape = 'u32[144,128]{1,0:T(1,128)}', space=vmem, size = 0x12000, scoped, tag = 'internal scratch']
  #allocation2 [shape = 'f32[1,1]{1,0:T(1,128)S(1)}', space=vmem, size = 0x200, scoped, tag = 'scoped memory for discriminator_forward.1']
  %s0 = inlined_call_operand.vmem [shape: bf16[32,128], index: 0, kind: input, shape index: {}]
  %s1 = inlined_call_operand.vmem [shape: bf16[32,32], index: 1, kind: input, shape index: {}]
  %s2 = inlined_call_operand.vmem [shape: f32[32,1], index: 2, kind: input, shape index: {}]
  %s3 = inlined_call_operand.vmem [shape: bf16[32,32], index: 3, kind: input, shape index: {}]
  %s4 = inlined_call_operand.vmem [shape: f32[32,1], index: 4, kind: input, shape index: {}]
  %s5 = inlined_call_operand.vmem [shape: bf16[1,32], index: 5, kind: input, shape index: {}]
  %s6 = inlined_call_operand.<no memory space> [shape: f32[1,1], index: 6, kind: input, shape index: {}]
  %s7 = inlined_call_operand.vmem [shape: f32[1,128], index: 7, kind: output, shape index: {}]
  %s8 = sld [smem:[#allocation0]]
  $region38: #{discriminator_forward.1} parent=0
    _
  %s10 = ssub.s32 1, %s8
  %s11 = scalar_select 0, %s10, %s8
  %v12 = vstv %s6
  %13 = vst [vmem:[#allocation2] sm:$0x1] %v12
  // Predicated region
  $region2: #{discriminator_forward.1} parent=0 // pred_check
    _
  $region3: #{discriminator_forward.1} parent=0 // pred_check_branch
    %15 = sbr.rel (0) target = $region5
  $region4: #{discriminator_forward.1} parent=0 // pred_region
    _
  $region5: #{discriminator_forward.1} parent=0 // pred_fallthru
    _
  // Predicated region
  $region6: #{discriminator_forward.1} parent=0 // pred_check
    _
  $region7: #{discriminator_forward.1} parent=0 // pred_check_branch
    %17 = sbr.rel (0) target = $region9
  $region8: #{discriminator_forward.1} parent=0 // pred_region
    _
  $region9: #{discriminator_forward.1} parent=0 // pred_fallthru
    _
  // Predicated region
  $region10: #{discriminator_forward.1} parent=0 // pred_check
    _
  $region11: #{discriminator_forward.1} parent=0 // pred_check_branch
    %19 = sbr.rel (0) target = $region13
  $region12: #{discriminator_forward.1} parent=0 // pred_region
    _
  $region13: #{discriminator_forward.1} parent=0 // pred_fallthru
    _
  // Predicated region
  $region14: #{discriminator_forward.1} parent=0 // pred_check
    _
  $region15: #{discriminator_forward.1} parent=0 // pred_check_branch
    %21 = sbr.rel (0) target = $region17
  $region16: #{discriminator_forward.1} parent=0 // pred_region
    _
  $region17: #{discriminator_forward.1} parent=0 // pred_fallthru
    _
  // Predicated region
  $region18: #{discriminator_forward.1} parent=0 // pred_check
    _
  $region19: #{discriminator_forward.1} parent=0 // pred_check_branch
    %23 = sbr.rel (0) target = $region21
  $region20: #{discriminator_forward.1} parent=0 // pred_region
    _
  $region21: #{discriminator_forward.1} parent=0 // pred_fallthru
    _
  // Predicated region
  $region22: #{discriminator_forward.1} parent=0 // pred_check
    _
  $region23: #{discriminator_forward.1} parent=0 // pred_check_branch
    %25 = sbr.rel (0) target = $region25
  $region24: #{discriminator_forward.1} parent=0 // pred_region
    _
  $region25: #{discriminator_forward.1} parent=0 // pred_fallthru
    _
  // Predicated region
  $region26: #{discriminator_forward.1} parent=0 // pred_check
    _
  $region27: #{discriminator_forward.1} parent=0 // pred_check_branch
    %27 = sbr.rel (0) target = $region29
  $region28: #{discriminator_forward.1} parent=0 // pred_region
    _
  $region29: #{discriminator_forward.1} parent=0 // pred_fallthru
    _
  %v29 = vld [vmem:[%s1] sm:$0xf]
  %v30 = vld [vmem:[%s1 + $0x4] sm:$0xf]
  %v31 = vld [vmem:[%s1 + $0x8] sm:$0xf]
  %v32 = vld [vmem:[%s1 + $0xc] sm:$0xf]
  %v33 = vld [vmem:[%s0] sm:$0xf]
  %v34 = vld [vmem:[%s0 + $0x4] sm:$0xf]
  %v35 = vld [vmem:[%s0 + $0x8] sm:$0xf]
  %v36 = vld [vmem:[%s0 + $0xc] sm:$0xf]
  %v37 = vld [vmem:[%s2] sm:$0xff]
  %v38 = vld [vmem:[%s2 + $0x8] sm:$0xff]
  %v39 = vld [vmem:[%s2 + $0x10] sm:$0xff]
  %v40 = vld [vmem:[%s2 + $0x18] sm:$0xff]
  %42 = vset.pattern.permute.xlu0 0
  %43 = vperm.xlu0 %42, %v37
  %v44 = vpop.permute.xlu0 %43
  %47 = vset.pattern.permute.xlu0 0
  %48 = vperm.xlu0 %47, %v38
  %v49 = vpop.permute.xlu0 %48
  %52 = vset.pattern.permute.xlu0 0
  %53 = vperm.xlu0 %52, %v39
  %v54 = vpop.permute.xlu0 %53
  %57 = vset.pattern.permute.xlu0 0
  %58 = vperm.xlu0 %57, %v40
  %v59 = vpop.permute.xlu0 %58
  %v65 = vunpack.c.l.b16 %v29
  %v66 = vunpack.c.l.b16 %v30
  %v67 = vunpack.c.l.b16 %v31
  %v68 = vunpack.c.l.b16 %v32
  %v69 = vpack.c.b16 %v66, %v65
  %v70 = vpack.c.b16 %v68, %v67
  %v75 = vunpack.c.l.b16 %v33
  %v76 = vunpack.c.l.b16 %v34
  %v77 = vunpack.c.l.b16 %v35
  %v78 = vunpack.c.l.b16 %v36
  %v79 = vpack.c.b16 %v76, %v75
  %v80 = vpack.c.b16 %v78, %v77
  %vm83 = vcmask 261120
  %v85 = vsel %vm83, %v69, 0
  %v88 = vsel %vm83, %v70, 0
  %90 = vmatprep.subr.bf16.mxu0 0
  %91 = vmatpush1.bf16.msra.mxu0 %v79
  %92 = vmatprep.subr.bf16.mxu0 0
  %93 = vmatpush1.bf16.msra.mxu0 %v80
  %94 = vmatprep.subr.bf16.mxu0 0
  %95 = vmatpush1.bf16.msra.mxu0 0
  %96 = vmatprep.subr.bf16.mxu0 0
  %97 = vmatpush1.bf16.msra.mxu0 0
  %98 = vmatprep.subr.bf16.mxu0 0
  %99 = vmatpush1.bf16.msra.mxu0 0
  %100 = vmatprep.subr.bf16.mxu0 0
  %101 = vmatpush1.bf16.msra.mxu0 0
  %102 = vmatprep.subr.bf16.mxu0 0
  %103 = vmatpush1.bf16.msra.mxu0 0
  %104 = vmatprep.subr.bf16.mxu0 0
  %105 = vmatpush1.bf16.msra.mxu0 0
  %106 = vmatprep.subr.bf16.mxu0 0
  %107 = vmatpush1.bf16.msra.mxu0 0
  %108 = vmatprep.subr.bf16.mxu0 0
  %109 = vmatpush1.bf16.msra.mxu0 0
  %110 = vmatprep.subr.bf16.mxu0 0
  %111 = vmatpush1.bf16.msra.mxu0 0
  %112 = vmatprep.subr.bf16.mxu0 0
  %113 = vmatpush1.bf16.msra.mxu0 0
  %114 = vmatprep.subr.bf16.mxu0 0
  %115 = vmatpush1.bf16.msra.mxu0 0
  %116 = vmatprep.subr.bf16.mxu0 0
  %117 = vmatpush1.bf16.msra.mxu0 0
  %118 = vmatprep.subr.bf16.mxu0 0
  %119 = vmatpush1.bf16.msra.mxu0 0
  %120 = vmatprep.subr.bf16.mxu0 0
  %121 = vmatpush1.bf16.msra.mxu0 0
  %122 = vmatprep.mubr.bf16.mxu0 0
  %123 = vmatmul.mubr.bf16.gmra.mrb[0].mxu0 %v85
  %v124 = vpop.f32.mrb[0].mxu0
  %v125 = vadd.f32 %v44, %v124
  %v126 = vpop.f32.mrb[0].mxu0
  %v127 = vpop.f32.mrb[0].mxu0
  %v128 = vadd.f32 %v49, %v127
  %v129 = vpop.f32.mrb[0].mxu0
  %130 = vmatprep.mubr.bf16.mxu0 0
  %131 = vmatmul.mubr.bf16.gmra.mrb[0].mxu0 %v88
  %v132 = vpop.f32.mrb[0].mxu0
  %v133 = vadd.f32 %v54, %v132
  %v134 = vpop.f32.mrb[0].mxu0
  %v135 = vpop.f32.mrb[0].mxu0
  %v136 = vadd.f32 %v59, %v135
  %v137 = vpop.f32.mrb[0].mxu0
  %138 = vdwg.mxu0
  %v139 = vmax.f32 %v125, 0.0
  %v140 = vmax.f32 %v128, 0.0
  %v141 = vmax.f32 %v133, 0.0
  %v142 = vmax.f32 %v136, 0.0
  %v143 = vld [vmem:[%s3] sm:$0xf]
  %v144 = vld [vmem:[%s3 + $0x4] sm:$0xf]
  %v145 = vld [vmem:[%s3 + $0x8] sm:$0xf]
  %v146 = vld [vmem:[%s3 + $0xc] sm:$0xf]
  %v147 = vpack.c.bf16 %v140, %v139
  %v148 = vpack.c.bf16 %v142, %v141
  %v149 = vld [vmem:[%s4] sm:$0xff]
  %v150 = vld [vmem:[%s4 + $0x8] sm:$0xff]
  %v151 = vld [vmem:[%s4 + $0x10] sm:$0xff]
  %v152 = vld [vmem:[%s4 + $0x18] sm:$0xff]
  %154 = vset.pattern.permute.xlu0 0
  %155 = vperm.xlu0 %154, %v149
  %v156 = vpop.permute.xlu0 %155
  %159 = vset.pattern.permute.xlu0 0
  %160 = vperm.xlu0 %159, %v150
  %v161 = vpop.permute.xlu0 %160
  %164 = vset.pattern.permute.xlu0 0
  %165 = vperm.xlu0 %164, %v151
  %v166 = vpop.permute.xlu0 %165
  %169 = vset.pattern.permute.xlu0 0
  %170 = vperm.xlu0 %169, %v152
  %v171 = vpop.permute.xlu0 %170
  %v177 = vunpack.c.l.b16 %v143
  %v178 = vunpack.c.l.b16 %v144
  %v179 = vunpack.c.l.b16 %v145
  %v180 = vunpack.c.l.b16 %v146
  %v181 = vpack.c.b16 %v178, %v177
  %v182 = vpack.c.b16 %v180, %v179
  %v184 = vsel %vm83, %v181, 0
  %v187 = vsel %vm83, %v182, 0
  %189 = vmatprep.subr.bf16.mxu0 0
  %190 = vmatpush1.bf16.msra.mxu0 %v147
  %191 = vmatprep.subr.bf16.mxu0 0
  %192 = vmatpush1.bf16.msra.mxu0 %v148
  %193 = vmatprep.subr.bf16.mxu0 0
  %194 = vmatpush1.bf16.msra.mxu0 0
  %195 = vmatprep.subr.bf16.mxu0 0
  %196 = vmatpush1.bf16.msra.mxu0 0
  %197 = vmatprep.subr.bf16.mxu0 0
  %198 = vmatpush1.bf16.msra.mxu0 0
  %199 = vmatprep.subr.bf16.mxu0 0
  %200 = vmatpush1.bf16.msra.mxu0 0
  %201 = vmatprep.subr.bf16.mxu0 0
  %202 = vmatpush1.bf16.msra.mxu0 0
  %203 = vmatprep.subr.bf16.mxu0 0
  %204 = vmatpush1.bf16.msra.mxu0 0
  %205 = vmatprep.subr.bf16.mxu0 0
  %206 = vmatpush1.bf16.msra.mxu0 0
  %207 = vmatprep.subr.bf16.mxu0 0
  %208 = vmatpush1.bf16.msra.mxu0 0
  %209 = vmatprep.subr.bf16.mxu0 0
  %210 = vmatpush1.bf16.msra.mxu0 0
  %211 = vmatprep.subr.bf16.mxu0 0
  %212 = vmatpush1.bf16.msra.mxu0 0
  %213 = vmatprep.subr.bf16.mxu0 0
  %214 = vmatpush1.bf16.msra.mxu0 0
  %215 = vmatprep.subr.bf16.mxu0 0
  %216 = vmatpush1.bf16.msra.mxu0 0
  %217 = vmatprep.subr.bf16.mxu0 0
  %218 = vmatpush1.bf16.msra.mxu0 0
  %219 = vmatprep.subr.bf16.mxu0 0
  %220 = vmatpush1.bf16.msra.mxu0 0
  %221 = vmatprep.mubr.bf16.mxu0 0
  %222 = vmatmul.mubr.bf16.gmra.mrb[0].mxu0 %v184
  %v223 = vpop.f32.mrb[0].mxu0
  %v224 = vadd.f32 %v156, %v223
  %v225 = vpop.f32.mrb[0].mxu0
  %v226 = vpop.f32.mrb[0].mxu0
  %v227 = vadd.f32 %v161, %v226
  %v228 = vpop.f32.mrb[0].mxu0
  %229 = vmatprep.mubr.bf16.mxu0 0
  %230 = vmatmul.mubr.bf16.gmra.mrb[0].mxu0 %v187
  %v231 = vpop.f32.mrb[0].mxu0
  %v232 = vadd.f32 %v166, %v231
  %v233 = vpop.f32.mrb[0].mxu0
  %v234 = vpop.f32.mrb[0].mxu0
  %v235 = vadd.f32 %v171, %v234
  %v236 = vpop.f32.mrb[0].mxu0
  %237 = vdwg.mxu0
  %v238 = vmax.f32 %v224, 0.0
  %v239 = vmax.f32 %v227, 0.0
  %v240 = vmax.f32 %v232, 0.0
  %v241 = vmax.f32 %v235, 0.0
  %v242 = vld [vmem:[%s5] sm:$0x1]
  %v243 = vpack.c.bf16 %v239, %v238
  %v244 = vpack.c.bf16 %v241, %v240
  %v245 = vld [vmem:[#allocation2] sm:$0x1]
  %247 = vset.pattern.permute.xlu0 0
  %248 = vperm.xlu0 %247, %v245
  %v249 = vpop.permute.xlu0 %248
  %v251 = vlaneseq
  %v252 = vshrl.u32 %v251, 7
  %v253 = vsub.s32 0, %v252
  %v254 = vrot.slane %v249, %v253
  %v256 = vsel %vm83, %v242, 0
  %258 = vmatprep.subr.bf16.mxu0 0
  %259 = vmatpush1.bf16.msra.mxu0 %v243
  %260 = vmatprep.subr.bf16.mxu0 0
  %261 = vmatpush1.bf16.msra.mxu0 %v244
  %262 = vmatprep.subr.bf16.mxu0 0
  %263 = vmatpush1.bf16.msra.mxu0 0
  %264 = vmatprep.subr.bf16.mxu0 0
  %265 = vmatpush1.bf16.msra.mxu0 0
  %266 = vmatprep.subr.bf16.mxu0 0
  %267 = vmatpush1.bf16.msra.mxu0 0
  %268 = vmatprep.subr.bf16.mxu0 0
  %269 = vmatpush1.bf16.msra.mxu0 0
  %270 = vmatprep.subr.bf16.mxu0 0
  %271 = vmatpush1.bf16.msra.mxu0 0
  %272 = vmatprep.subr.bf16.mxu0 0
  %273 = vmatpush1.bf16.msra.mxu0 0
  %274 = vmatprep.subr.bf16.mxu0 0
  %275 = vmatpush1.bf16.msra.mxu0 0
  %276 = vmatprep.subr.bf16.mxu0 0
  %277 = vmatpush1.bf16.msra.mxu0 0
  %278 = vmatprep.subr.bf16.mxu0 0
  %279 = vmatpush1.bf16.msra.mxu0 0
  %280 = vmatprep.subr.bf16.mxu0 0
  %281 = vmatpush1.bf16.msra.mxu0 0
  %282 = vmatprep.subr.bf16.mxu0 0
  %283 = vmatpush1.bf16.msra.mxu0 0
  %284 = vmatprep.subr.bf16.mxu0 0
  %285 = vmatpush1.bf16.msra.mxu0 0
  %286 = vmatprep.subr.bf16.mxu0 0
  %287 = vmatpush1.bf16.msra.mxu0 0
  %288 = vmatprep.subr.bf16.mxu0 0
  %289 = vmatpush1.bf16.msra.mxu0 0
  %290 = vmatprep.mubr.bf16.mxu0 0
  %291 = vmatmul.mubr.bf16.gmra.mrb[0].mxu0 %v256
  %v292 = vpop.f32.mrb[0].mxu0
  %v293 = vadd.f32 %v254, %v292
  %v294 = vpop.f32.mrb[0].mxu0
  %v295 = vpop.f32.mrb[0].mxu0
  %v296 = vpop.f32.mrb[0].mxu0
  %297 = vdwg.mxu0
  %v298 = vsub.f32 0.0, %v293
  %v299 = vmul.f32 %v298, 1.442695
  %v300 = vpow.pop %v299
  %v301 = vadd.f32 %v300, 1.0
  %v302 = vrcp.pop %v301
  %v303 = vmul.f32 1.0, %v302
  %304 = vst [vmem:[%s7] sm:$0x1] %v303
  // Predicated region
  $region30: #{discriminator_forward.1} parent=0 // pred_check
    _
  $region31: #{discriminator_forward.1} parent=0 // pred_check_branch
    %306 = sbr.rel (0) target = $region33
  $region32: #{discriminator_forward.1} parent=0 // pred_region
    _
  $region33: #{discriminator_forward.1} parent=0 // pred_fallthru
    _
  // Predicated region
  $region34: #{discriminator_forward.1} parent=0 // pred_check
    _
  $region35: #{discriminator_forward.1} parent=0 // pred_check_branch
    %308 = sbr.rel (0) target = $region37
  $region36: #{discriminator_forward.1} parent=0 // pred_region
    _
  $region37: #{discriminator_forward.1} parent=0 // pred_fallthru
    _

</llo_original>
